<compile_context>
chip_gen: v5e
topology: v5e:2x2
jax: 0.10.0
libtpu: 0.0.40
codegen_flags: <defaults>
</compile_context>

<pallas_src>
import jax
import jax.numpy as jnp
from jax.experimental import pallas as pl
from jax.experimental.pallas import tpu as pltpu

STRIDE = 8          # fixed by the module (stride=8 in every Conv1d)
_ROW_TILE = 1024    # B*T_out rows per grid step (>=2 steps always, for v7x megacore)


def _round_up(v, m):
    return -(-v // m) * m


def conv1d_subsampler_fused_2layer(x, w0, b0, w1, b1, k0, k1):
    """Fused Conv1d(k0,s=8)+GLU -> Conv1d(k1,s=8)+GLU in one pallas_call.

    x : (B, T, C_in)            time-major activations (channels last)
    w0: (C_mid, C_in, k0), b0: (C_mid,)           PyTorch Conv1d layouts
    w1: (2*C_out, C_mid//2, k1), b1: (2*C_out,)
    returns (B, T_out1, C_out)
    """
    B, T, C_in = x.shape
    C_mid, C_out2 = w0.shape[0], w1.shape[0]
    assert C_mid % 2 == 0 and C_out2 % 2 == 0
    C_h0, C_out = C_mid // 2, C_out2 // 2
    assert w0.shape == (C_mid, C_in, k0) and b0.shape == (C_mid,)
    assert w1.shape == (C_out2, C_h0, k1) and b1.shape == (C_out2,)
    assert k0 <= STRIDE and k1 <= STRIDE, "tap folding requires kernel_size <= stride"

    p0, p1 = k0 // 2, k1 // 2
    T_out0 = (T + 2 * p0 - k0) // STRIDE + 1
    T_out1 = (T_out0 + 2 * p1 - k1) // STRIDE + 1
    assert T_out0 >= 1 and T_out1 >= 1

    Kx = k1 * STRIDE * C_in       # width of one gathered window (one output row)
    Kh = k1 * C_h0                # layer-0 outputs feeding one output row
    G0 = _round_up(Kh, 128)       # layer-0 gate-half lane offset (vreg boundary)
    N0 = 2 * G0                   # merged layer-0 output width
    G1 = _round_up(C_out, 128)    # layer-1 gate-half lane offset
    N1 = 2 * G1
    Nb = max(N0, N1)

    # ---- gather input windows: one row per final output step ------------------
    # With a left zero-pad of P = 8*p1 + p0, final output row t reads exactly the
    # 8*k1 consecutive padded input steps [t*64, t*64 + 8*k1): pad+reshape+slice.
    P = STRIDE * p1 + p0
    L = STRIDE * STRIDE * T_out1
    right = max(L - P - T, 0)
    xp = jnp.pad(x, ((0, 0), (P, right), (0, 0)))[:, :L, :]
    Xw = (xp.reshape(B, T_out1, STRIDE * STRIDE * C_in)[:, :, :Kx]
            .reshape(B * T_out1, Kx)
            .astype(jnp.bfloat16))                       # dominant HBM stream: bf16

    # ---- fold weights (f32 build, bf16 on the wire) ----------------------------
    f32 = jnp.float32
    # Layer 0: (tap, in, out) with taps zero-padded k0 -> 8.
    wf0 = jnp.zeros((STRIDE, C_in, C_mid), f32)
    wf0 = wf0.at[:k0].set(jnp.transpose(w0, (2, 1, 0)).astype(f32))
    wf0 = wf0.reshape(STRIDE * C_in, C_mid)
    w0a_1, w0g_1 = wf0[:, :C_h0], wf0[:, C_h0:]
    # Block-diagonal over the k1 layer-1 taps; a-half in lanes [0,Kh),
    # gate-half in lanes [G0, G0+Kh)  (128-lane-aligned -> free split in-kernel).
    W0m = jnp.zeros((Kx, N0), f32)
    for j in range(k1):
        rs, cs = j * STRIDE * C_in, j * C_h0
        W0m = W0m.at[rs:rs + STRIDE * C_in, cs:cs + C_h0].set(w0a_1)
        W0m = W0m.at[rs:rs + STRIDE * C_in, G0 + cs:G0 + cs + C_h0].set(w0g_1)
    W0m = W0m.astype(jnp.bfloat16)

    # Layer 1: taps concatenated along the contraction dim; merged GLU halves.
    w1t = jnp.transpose(w1, (2, 1, 0)).reshape(Kh, C_out2).astype(f32)
    W1m = jnp.zeros((G0, N1), f32)
    W1m = W1m.at[:Kh, :C_out].set(w1t[:, :C_out])
    W1m = W1m.at[:Kh, G1:G1 + C_out].set(w1t[:, C_out:])
    W1m = W1m.astype(jnp.bfloat16)

    # Biases: one (2, Nb) f32 array -> a single grid-invariant stream.
    Bm = jnp.zeros((2, Nb), f32)
    Bm = Bm.at[0, :Kh].set(jnp.tile(b0[:C_h0].astype(f32), k1))
    Bm = Bm.at[0, G0:G0 + Kh].set(jnp.tile(b0[C_h0:].astype(f32), k1))
    Bm = Bm.at[1, :C_out].set(b1[:C_out].astype(f32))
    Bm = Bm.at[1, G1:G1 + C_out].set(b1[C_out:].astype(f32))

    # ---- row tiling: always >= 2 grid steps (v7x has 2 TensorCores) ------------
    M = B * T_out1
    n_tiles = max(2, -(-M // _ROW_TILE))
    TM = _round_up(-(-M // n_tiles), 8)      # sublane-aligned block rows
    M_pad = n_tiles * TM
    assert M_pad < (1 << 22), "float mod trick below assumes < 4M output rows"
    if M_pad != M:
        Xw = jnp.pad(Xw, ((0, M_pad - M), (0, 0)))   # tail rows sliced off below

    inv_T1 = 1.0 / T_out1

    def kernel(x_ref, w0_ref, w1_ref, b_ref, o_ref):
        # ---- layer 0: one merged-GLU matmul (bf16 MXU, f32 accumulate) ----------
        xv = x_ref[...]                                            # (TM, Kx) bf16
        z0 = jnp.dot(xv, w0_ref[...], preferred_element_type=jnp.float32)
        z0 = z0 + b_ref[0:1, :N0]                                  # (TM, N0) f32
        a0, g0 = z0[:, :G0], z0[:, G0:]                            # 128-lane split

        # ---- layer-1 "same" padding of h: zero tap groups whose layer-0 time
        # index s = t*8 - p1 + j is outside [0, T_out0).  t = row % T_out1 is
        # computed exactly with an f32 floor-division (no vector int div/mod).
        r_i = jax.lax.broadcasted_iota(jnp.int32, (TM, 1), 0) + pl.program_id(0) * TM
        r_f = r_i.astype(jnp.float32)
        q = jnp.floor((r_f + 0.5) * inv_T1)                        # exact: rows < 2^22
        t = (r_f - q * T_out1).astype(jnp.int32)                   # (TM, 1) int32
        c = jax.lax.broadcasted_iota(jnp.int32, (1, G0), 1)        # h column index
        lo = (p1 - STRIDE * t) * C_h0                              # valid iff c >= lo
        hi = (T_out0 + p1 - STRIDE * t) * C_h0                     #        and c < hi
        valid = jnp.logical_and(c >= lo, c < hi)
        h = jnp.where(valid, a0 * jax.nn.sigmoid(g0), 0.0)         # (TM, G0) f32

        # ---- layer 1: one merged-GLU matmul ------------------------------------
        z1 = jnp.dot(h.astype(jnp.bfloat16), w1_ref[...],
                     preferred_element_type=jnp.float32)
        z1 = z1 + b_ref[1:2, :N1]                                  # (TM, N1) f32
        a1, g1 = z1[:, :G1], z1[:, G1:]
        y = a1 * jax.nn.sigmoid(g1)
        # TODO(synk): if masked 16-lane stores ever show up in profiles, emit a
        # packed (TM//8, 8*C_out) lane-dense slab here and unpack in the wrapper.
        o_ref[...] = y[:, :C_out].astype(o_ref.dtype)

    out = pl.pallas_call(
        kernel,
        out_shape=jax.ShapeDtypeStruct((M_pad, C_out), x.dtype),
        grid_spec=pltpu.PrefetchScalarGridSpec(
            num_scalar_prefetch=0,
            grid=(n_tiles,),
            in_specs=[
                pl.BlockSpec((TM, Kx), lambda i: (i, 0)),   # Xw: only per-row stream
                pl.BlockSpec((Kx, N0), lambda i: (0, 0)),   # W0 (grid-invariant)
                pl.BlockSpec((G0, N1), lambda i: (0, 0)),   # W1 (grid-invariant)
                pl.BlockSpec((2, Nb), lambda i: (0, 0)),    # biases (grid-invariant)
            ],
            out_specs=pl.BlockSpec((TM, C_out), lambda i: (i, 0)),
        ),
        compiler_params=pltpu.CompilerParams(dimension_semantics=("parallel",)),
    )(Xw, W0m, W1m, Bm)

    return out[:M].reshape(B, T_out1, C_out)


def conv1d_subsampler_forward(src_tokens, src_lengths, params, kernel_sizes):
    """Matches Conv1dSubsampler.forward: returns ((B, T_out, C_out), out_lengths)."""
    # TODO(synk): only the default 2-layer configuration is fused here; other
    # depths would need chained kernels or a generalized window gather.
    assert len(kernel_sizes) == 2 and len(params) == 2
    (w0, b0), (w1, b1) = params
    k0, k1 = kernel_sizes
    y = conv1d_subsampler_fused_2layer(src_tokens, w0, b0, w1, b1, k0, k1)

    out_lens = None
    if src_lengths is not None:                 # scalar metadata: plain JAX
        out = src_lengths.astype(jnp.int32)
        for _ in range(len(kernel_sizes)):
            out = jnp.floor((out.astype(jnp.float32) - 1.0) / 8.0 + 1.0).astype(jnp.int32)
        out_lens = out
    return y, out_lens


def _reference_forward(src_tokens, src_lengths, params, kernel_sizes,
                       in_dtype=jnp.float32):
    """Pure-JAX reference mirroring the PyTorch module (NCT conv + GLU).

    in_dtype=bfloat16 gives a precision-matched reference (bf16 operands,
    f32 accumulation) for a tight check of the folding/masking logic.
    """
    x = jnp.transpose(src_tokens, (0, 2, 1))  # (B, C, T)
    for (w, b), k in zip(params, kernel_sizes):
        x = jax.lax.conv_general_dilated(
            x.astype(in_dtype), w.astype(in_dtype),
            window_strides=(STRIDE,), padding=[(k // 2, k // 2)],
            dimension_numbers=("NCH", "OIH", "NCH"),
            preferred_element_type=jnp.float32)
        x = x + b.astype(jnp.float32)[None, :, None]
        c = x.shape[1] // 2
        x = x[:, :c] * jax.nn.sigmoid(x[:, c:])  # F.glu(dim=1), f32
    x = jnp.transpose(x, (0, 2, 1))
    out = src_lengths.astype(jnp.int32)
    for _ in range(len(kernel_sizes)):
        out = jnp.floor((out.astype(jnp.float32) - 1.0) / 8.0 + 1.0).astype(jnp.int32)
    return x, out


if __name__ == "__main__":
    # Module config: Conv1dSubsampler(in_channels=16, mid_channels=32,
    #                                 out_channels=16, kernel_sizes=[3, 3])
    B, C_in, C_mid, C_out = 2, 16, 32, 16
    kernel_sizes = [3, 3]

    key = jax.random.PRNGKey(0)
    ka, kb, kc, kd, ke = jax.random.split(key, 5)
    w0 = 0.1 * jax.random.normal(ka, (C_mid, C_in, kernel_sizes[0]), jnp.float32)
    b0 = 0.1 * jax.random.normal(kb, (C_mid,), jnp.float32)
    w1 = 0.1 * jax.random.normal(kc, (2 * C_out, C_mid // 2, kernel_sizes[1]), jnp.float32)
    b1 = 0.1 * jax.random.normal(kd, (2 * C_out,), jnp.float32)
    params = [(w0, b0), (w1, b1)]

    fwd = jax.jit(lambda st, sl: conv1d_subsampler_forward(st, sl, params, kernel_sizes))

    # T=128 (clean), T=72 and T=200 (exercise the right-edge h-padding rows
    # where layer 1 reads a zero h position past T_out0, plus row padding).
    for T, lens in ((128, (128, 100)), (72, (72, 50)), (200, (200, 131))):
        src_tokens = jax.random.normal(jax.random.fold_in(ke, T), (B, T, C_in), jnp.float32)
        src_lengths = jnp.array(lens, jnp.int32)

        y, out_lens = fwd(src_tokens, src_lengths)
        y = jax.block_until_ready(y)
        out_lens = jax.block_until_ready(out_lens)

        # Tight check vs a bf16-precision-matched reference (validates folding,
        # masking and tiling logic independent of quantization error).
        y_bf, _ = _reference_forward(src_tokens, src_lengths, params, kernel_sizes,
                                     in_dtype=jnp.bfloat16)
        assert y.shape == y_bf.shape, (y.shape, y_bf.shape)
        err_bf = float(jnp.max(jnp.abs(y - y_bf)))
        assert err_bf < 5e-3, ("mismatch vs bf16-matched reference", err_bf)

        # Loose check vs the full-f32 module semantics (bf16 data path).
        y_ref, lens_ref = _reference_forward(src_tokens, src_lengths, params, kernel_sizes)
        err = float(jnp.max(jnp.abs(y - y_ref)))
        assert err < 5e-2, ("mismatch vs f32 reference", err)
        assert jnp.array_equal(out_lens, lens_ref), "length mismatch vs reference"

    print("KERNEL_OK")
</pallas_src>

<mosaic_0001>
module attributes {stable_mosaic.version = 11 : i64} {
  func.func @kernel(%arg0: i32, %arg1: memref<8x384xbf16, #tpu.memory_space<vmem>>, %arg2: memref<384x256xbf16, #tpu.memory_space<vmem>>, %arg3: memref<128x256xbf16, #tpu.memory_space<vmem>>, %arg4: memref<2x256xf32, #tpu.memory_space<vmem>>, %arg5: memref<8x16xf32, #tpu.memory_space<vmem>>) attributes {dimension_semantics = [#tpu.dimension_semantics<parallel>], iteration_bounds = array<i64: 2>, scalar_prefetch = 0 : i64, scratch_operands = 0 : i64, tpu.core_type = #tpu.core_type<tc>, window_params = [{transform_indices = @transform_0, window_bounds = array<i64: 8, 384>}, {pipeline_mode = #tpu.pipeline_mode<synchronous>, transform_indices = @transform_1, window_bounds = array<i64: 384, 256>}, {pipeline_mode = #tpu.pipeline_mode<synchronous>, transform_indices = @transform_2, window_bounds = array<i64: 128, 256>}, {pipeline_mode = #tpu.pipeline_mode<synchronous>, transform_indices = @transform_3, window_bounds = array<i64: 2, 256>}, {transform_indices = @transform_4, window_bounds = array<i64: 8, 16>}]} {
    %c0 = arith.constant 0 : index
    %c0_0 = arith.constant 0 : index
    %0 = vector.load %arg1[%c0, %c0_0] : memref<8x384xbf16, #tpu.memory_space<vmem>>, vector<8x384xbf16>
    %c0_1 = arith.constant 0 : index
    %c0_2 = arith.constant 0 : index
    %1 = vector.load %arg2[%c0_1, %c0_2] : memref<384x256xbf16, #tpu.memory_space<vmem>>, vector<384x256xbf16>
    %cst = arith.constant dense<0.000000e+00> : vector<8x256xf32>
    %2 = tpu.matmul %0, %1, %cst {dimension_numbers = #tpu.dot_dimension_numbers<[1], [0], [0], [1], [0, 0, 1, 1], [], []>} : vector<8x384xbf16>, vector<384x256xbf16>, vector<8x256xf32> -> vector<8x256xf32>
    %c0_3 = arith.constant 0 : index
    %c0_4 = arith.constant 0 : index
    %3 = vector.load %arg4[%c0_3, %c0_4] : memref<2x256xf32, #tpu.memory_space<vmem>>, vector<1x256xf32>
    %4 = vector.broadcast %3 : vector<1x256xf32> to vector<8x256xf32>
    %5 = arith.addf %2, %4 : vector<8x256xf32>
    %6 = vector.extract_strided_slice %5 {offsets = [0, 0], sizes = [8, 128], strides = [1, 1]} : vector<8x256xf32> to vector<8x128xf32>
    %7 = vector.extract_strided_slice %5 {offsets = [0, 128], sizes = [8, 128], strides = [1, 1]} : vector<8x256xf32> to vector<8x128xf32>
    %8 = tpu.iota {dimensions = array<i32: 0>} : vector<8x1xi32>
    %c8_i32 = arith.constant 8 : i32
    %9 = arith.muli %arg0, %c8_i32 : i32
    %10 = vector.broadcast %9 : i32 to vector<8x1xi32>
    %11 = arith.addi %8, %10 : vector<8x1xi32>
    %12 = arith.sitofp %11 : vector<8x1xi32> to vector<8x1xf32>
    %cst_5 = arith.constant 5.000000e-01 : f32
    %13 = vector.broadcast %cst_5 : f32 to vector<8x1xf32>
    %14 = arith.addf %12, %13 : vector<8x1xf32>
    %cst_6 = arith.constant 5.000000e-01 : f32
    %15 = vector.broadcast %cst_6 : f32 to vector<8x1xf32>
    %16 = arith.mulf %14, %15 : vector<8x1xf32>
    %17 = math.floor %16 : vector<8x1xf32>
    %cst_7 = arith.constant 2.000000e+00 : f32
    %18 = vector.broadcast %cst_7 : f32 to vector<8x1xf32>
    %19 = arith.mulf %17, %18 : vector<8x1xf32>
    %20 = arith.subf %12, %19 : vector<8x1xf32>
    %21 = arith.fptosi %20 : vector<8x1xf32> to vector<8x1xi32>
    %22 = tpu.iota {dimensions = array<i32: 1>} : vector<1x128xi32>
    %c8_i32_8 = arith.constant 8 : i32
    %23 = vector.broadcast %c8_i32_8 : i32 to vector<8x1xi32>
    %24 = arith.muli %23, %21 : vector<8x1xi32>
    %c1_i32 = arith.constant 1 : i32
    %25 = vector.broadcast %c1_i32 : i32 to vector<8x1xi32>
    %26 = arith.subi %25, %24 : vector<8x1xi32>
    %c16_i32 = arith.constant 16 : i32
    %27 = vector.broadcast %c16_i32 : i32 to vector<8x1xi32>
    %28 = arith.muli %26, %27 : vector<8x1xi32>
    %c8_i32_9 = arith.constant 8 : i32
    %29 = vector.broadcast %c8_i32_9 : i32 to vector<8x1xi32>
    %30 = arith.muli %29, %21 : vector<8x1xi32>
    %c17_i32 = arith.constant 17 : i32
    %31 = vector.broadcast %c17_i32 : i32 to vector<8x1xi32>
    %32 = arith.subi %31, %30 : vector<8x1xi32>
    %c16_i32_10 = arith.constant 16 : i32
    %33 = vector.broadcast %c16_i32_10 : i32 to vector<8x1xi32>
    %34 = arith.muli %32, %33 : vector<8x1xi32>
    %35 = vector.broadcast %22 : vector<1x128xi32> to vector<8x128xi32>
    %36 = vector.broadcast %28 : vector<8x1xi32> to vector<8x128xi32>
    %37 = arith.cmpi sge, %35, %36 : vector<8x128xi32>
    %38 = vector.broadcast %22 : vector<1x128xi32> to vector<8x128xi32>
    %39 = vector.broadcast %34 : vector<8x1xi32> to vector<8x128xi32>
    %40 = arith.cmpi slt, %38, %39 : vector<8x128xi32>
    %41 = arith.andi %37, %40 : vector<8x128xi1>
    %42 = arith.negf %7 : vector<8x128xf32>
    %43 = math.exp %42 : vector<8x128xf32>
    %cst_11 = arith.constant 1.000000e+00 : f32
    %44 = vector.broadcast %cst_11 : f32 to vector<8x128xf32>
    %45 = arith.addf %44, %43 : vector<8x128xf32>
    %46 = arith.divf %44, %45 : vector<8x128xf32>
    %47 = arith.mulf %6, %46 : vector<8x128xf32>
    %cst_12 = arith.constant 0.000000e+00 : f32
    %48 = vector.broadcast %cst_12 : f32 to vector<8x128xf32>
    %49 = arith.select %41, %47, %48 : vector<8x128xi1>, vector<8x128xf32>
    %50 = arith.truncf %49 : vector<8x128xf32> to vector<8x128xbf16>
    %c0_13 = arith.constant 0 : index
    %c0_14 = arith.constant 0 : index
    %51 = vector.load %arg3[%c0_13, %c0_14] : memref<128x256xbf16, #tpu.memory_space<vmem>>, vector<128x256xbf16>
    %cst_15 = arith.constant dense<0.000000e+00> : vector<8x256xf32>
    %52 = tpu.matmul %50, %51, %cst_15 {dimension_numbers = #tpu.dot_dimension_numbers<[1], [0], [0], [1], [0, 0, 1, 1], [], []>} : vector<8x128xbf16>, vector<128x256xbf16>, vector<8x256xf32> -> vector<8x256xf32>
    %c1 = arith.constant 1 : index
    %c0_16 = arith.constant 0 : index
    %53 = vector.load %arg4[%c1, %c0_16] : memref<2x256xf32, #tpu.memory_space<vmem>>, vector<1x256xf32>
    %54 = vector.broadcast %53 : vector<1x256xf32> to vector<8x256xf32>
    %55 = arith.addf %52, %54 : vector<8x256xf32>
    %56 = vector.extract_strided_slice %55 {offsets = [0, 0], sizes = [8, 128], strides = [1, 1]} : vector<8x256xf32> to vector<8x128xf32>
    %57 = vector.extract_strided_slice %55 {offsets = [0, 128], sizes = [8, 128], strides = [1, 1]} : vector<8x256xf32> to vector<8x128xf32>
    %58 = arith.negf %57 : vector<8x128xf32>
    %59 = math.exp %58 : vector<8x128xf32>
    %cst_17 = arith.constant 1.000000e+00 : f32
    %60 = vector.broadcast %cst_17 : f32 to vector<8x128xf32>
    %61 = arith.addf %60, %59 : vector<8x128xf32>
    %62 = arith.divf %60, %61 : vector<8x128xf32>
    %63 = arith.mulf %56, %62 : vector<8x128xf32>
    %64 = vector.extract_strided_slice %63 {offsets = [0, 0], sizes = [8, 16], strides = [1, 1]} : vector<8x128xf32> to vector<8x16xf32>
    %c0_18 = arith.constant 0 : index
    %c0_19 = arith.constant 0 : index
    %65 = vector.load %arg5[%c0_18, %c0_19] : memref<8x16xf32, #tpu.memory_space<vmem>>, vector<8x16xf32>
    tpu.vector_store %arg5[%c0_18, %c0_19], %64 {strides = array<i32>} : memref<8x16xf32, #tpu.memory_space<vmem>>, vector<8x16xf32>,
    return
  }
  func.func @transform_0(%arg0: i32) -> (i32, i32) {
    %c0_i32 = arith.constant 0 : i32
    %c0_i32_0 = arith.constant 0 : i32
    return %arg0, %c0_i32 : i32, i32
  }
  func.func @transform_1(%arg0: i32) -> (i32, i32) {
    %c0_i32 = arith.constant 0 : i32
    %c0_i32_0 = arith.constant 0 : i32
    %c0_i32_1 = arith.constant 0 : i32
    return %c0_i32, %c0_i32_0 : i32, i32
  }
  func.func @transform_2(%arg0: i32) -> (i32, i32) {
    %c0_i32 = arith.constant 0 : i32
    %c0_i32_0 = arith.constant 0 : i32
    %c0_i32_1 = arith.constant 0 : i32
    return %c0_i32, %c0_i32_0 : i32, i32
  }
  func.func @transform_3(%arg0: i32) -> (i32, i32) {
    %c0_i32 = arith.constant 0 : i32
    %c0_i32_0 = arith.constant 0 : i32
    %c0_i32_1 = arith.constant 0 : i32
    return %c0_i32, %c0_i32_0 : i32, i32
  }
  func.func @transform_4(%arg0: i32) -> (i32, i32) {
    %c0_i32 = arith.constant 0 : i32
    %c0_i32_0 = arith.constant 0 : i32
    return %arg0, %c0_i32 : i32, i32
  }
}

</mosaic_0001>

<llo_original>
// kernel: tile.10
$region0: #{tile.10}
  #allocation0 [shape = 's32[1]{0}', space=sflag, size = 0x4, scoped, tag = 'scoped memory for tile.10']
  %s0 = inlined_call_operand.vmem [shape: f32[16], index: 0, kind: input, shape index: {}]
  %s1 = inlined_call_operand.vmem [shape: f32[3,16], index: 1, kind: output, shape index: {}]
  // Predicated region
  $region2: #{tile.10} parent=0 // pred_check
    _
  $region3: #{tile.10} parent=0 // pred_check_branch
    %3 = sbr.rel (0) target = $region5
  $region4: #{tile.10} parent=0 // pred_region
    _
  $region5: #{tile.10} parent=0 // pred_fallthru
    _
  %v4 = vld [vmem:[%s0] ss:$0 sm:$0xff]
  %5 = vst [vmem:[%s1] sm:$0xf] %v4

// kernel: _lambda_.1
$region0: #{_lambda_.1}
  #allocation0 [shape = 'u32[]', space=smem, size = 0x4, offset = 0x4, fixed_abs, tag = 'smem constant byte address 0x4 - core index']
  #allocation1 [shape = 'u32[72,128]{1,0:T(1,128)}', space=vmem, size = 0x9000, scoped, tag = 'internal scratch']
  %s0 = inlined_call_operand.vmem [shape: bf16[16,384], index: 0, kind: input, shape index: {}]
  %s1 = inlined_call_operand.vmem [shape: bf16[384,256], index: 1, kind: input, shape index: {}]
  %s2 = inlined_call_operand.vmem [shape: bf16[128,256], index: 2, kind: input, shape index: {}]
  %s3 = inlined_call_operand.vmem [shape: f32[2,256], index: 3, kind: input, shape index: {}]
  %s4 = inlined_call_operand.vmem [shape: f32[16,16], index: 4, kind: output, shape index: {}]
  %s5 = sld [smem:[#allocation0]]
  $region49: #{_lambda_.1} parent=0
    _
  %s7 = ssub.s32 1, %s5
  %s8 = scalar_select 0, %s7, %s5
  loop: start=0, step=1, limit=4
  $region2: #{_lambda_.1} parent=0 // loop_pre_header
    _
  $region3: #{_lambda_.1} parent=0 // loop_header
    %s10 = sphi 0, %s14
    %p11 = scmp.ge.s32.totalorder %s10, 4
    %s20 = sphi 0, %s22
    %s23 = sphi 0, %s20
    %s24 = sphi 0, %s23
    %s40 = sphi 0, %s24
    %s44 = sphi 0, %s44
    %s46 = sphi 0, %s44
    %s47 = sphi 0, %s46
    %s61 = sphi 0, %s47
    %s65 = sphi 0, %s65
    %s67 = sphi 0, %s65
    %s68 = sphi 0, %s67
    %s82 = sphi 0, %s68
    %s86 = sphi 0, %s86
    %s88 = sphi 0, %s86
    %s89 = sphi 0, %s88
    %s103 = sphi 0, %s89
    %s109 = sphi 0, %s111
    %s112 = sphi 0, %s109
    %s113 = sphi 0, %s112
    %s129 = sphi 0, %s113
  $region4: #{_lambda_.1} parent=0 // loop_header_branch
    %13 = sbr.rel (%p11) target = $region8
  $region5: #{_lambda_.1} parent=0 // loop_body
    %s15 = ssub.s32 %s10, 1
    %s16 = ssub.s32 %s10, 2
    %s17 = sadd.s32 %s10, 1
    %s18 = ssub.s32 %s10, %s17
    %p19 = scmp.eq.s32.totalorder %s18, 0
    %s21 = sadd.s32 %s20, 1
    %s22 = scalar_select %p19, %s20, %s21
    %p25 = pneg %p19
    %p26 = scmp.eq.s32.totalorder %s10, 1
    %p27 = por %p25, %p26
    %p28 = scmp.ne.s32.totalorder %s20, %s23
    %p29 = scmp.eq.s32.totalorder %s10, 0
    %p30 = por %p28, %p29
    %p31 = scmp.ne.s32.totalorder %s20, %s23
    %p32 = scmp.eq.s32.totalorder %s15, 1
    %p33 = por %p31, %p32
    %p34 = scmp.ne.s32.totalorder %s23, %s24
    %p35 = scmp.eq.s32.totalorder %s15, 0
    %p36 = por %p34, %p35
    %p37 = scmp.ne.s32.totalorder %s23, %s24
    %p38 = scmp.eq.s32.totalorder %s16, 1
    %p39 = por %p37, %p38
    %p41 = scmp.ne.s32.totalorder %s24, %s40
    %p42 = scmp.eq.s32.totalorder %s16, 0
    %p43 = por %p41, %p42
    %s45 = sadd.s32 %s44, 1
    %p48 = scmp.eq.s32.totalorder %s10, 1
    %p49 = scmp.ne.s32.totalorder %s44, %s46
    %p50 = scmp.eq.s32.totalorder %s10, 0
    %p51 = por %p49, %p50
    %p52 = scmp.ne.s32.totalorder %s44, %s46
    %p53 = scmp.eq.s32.totalorder %s15, 1
    %p54 = por %p52, %p53
    %p55 = scmp.ne.s32.totalorder %s46, %s47
    %p56 = scmp.eq.s32.totalorder %s15, 0
    %p57 = por %p55, %p56
    %p58 = scmp.ne.s32.totalorder %s46, %s47
    %p59 = scmp.eq.s32.totalorder %s16, 1
    %p60 = por %p58, %p59
    %p62 = scmp.ne.s32.totalorder %s47, %s61
    %p63 = scmp.eq.s32.totalorder %s16, 0
    %p64 = por %p62, %p63
    %s66 = sadd.s32 %s65, 1
    %p69 = scmp.eq.s32.totalorder %s10, 1
    %p70 = scmp.ne.s32.totalorder %s65, %s67
    %p71 = scmp.eq.s32.totalorder %s10, 0
    %p72 = por %p70, %p71
    %p73 = scmp.ne.s32.totalorder %s65, %s67
    %p74 = scmp.eq.s32.totalorder %s15, 1
    %p75 = por %p73, %p74
    %p76 = scmp.ne.s32.totalorder %s67, %s68
    %p77 = scmp.eq.s32.totalorder %s15, 0
    %p78 = por %p76, %p77
    %p79 = scmp.ne.s32.totalorder %s67, %s68
    %p80 = scmp.eq.s32.totalorder %s16, 1
    %p81 = por %p79, %p80
    %p83 = scmp.ne.s32.totalorder %s68, %s82
    %p84 = scmp.eq.s32.totalorder %s16, 0
    %p85 = por %p83, %p84
    %s87 = sadd.s32 %s86, 1
    %p90 = scmp.eq.s32.totalorder %s10, 1
    %p91 = scmp.ne.s32.totalorder %s86, %s88
    %p92 = scmp.eq.s32.totalorder %s10, 0
    %p93 = por %p91, %p92
    %p94 = scmp.ne.s32.totalorder %s86, %s88
    %p95 = scmp.eq.s32.totalorder %s15, 1
    %p96 = por %p94, %p95
    %p97 = scmp.ne.s32.totalorder %s88, %s89
    %p98 = scmp.eq.s32.totalorder %s15, 0
    %p99 = por %p97, %p98
    %p100 = scmp.ne.s32.totalorder %s88, %s89
    %p101 = scmp.eq.s32.totalorder %s16, 1
    %p102 = por %p100, %p101
    %p104 = scmp.ne.s32.totalorder %s89, %s103
    %p105 = scmp.eq.s32.totalorder %s16, 0
    %p106 = por %p104, %p105
    %s107 = ssub.s32 %s10, %s17
    %p108 = scmp.eq.s32.totalorder %s107, 0
    %s110 = sadd.s32 %s109, 1
    %s111 = scalar_select %p108, %s109, %s110
    %p114 = pneg %p108
    %p115 = scmp.eq.s32.totalorder %s10, 1
    %p116 = por %p114, %p115
    %p117 = scmp.ne.s32.totalorder %s109, %s112
    %p118 = scmp.eq.s32.totalorder %s10, 0
    %p119 = por %p117, %p118
    %p120 = scmp.ne.s32.totalorder %s109, %s112
    %p121 = scmp.eq.s32.totalorder %s15, 1
    %p122 = por %p120, %p121
    %p123 = scmp.ne.s32.totalorder %s112, %s113
    %p124 = scmp.eq.s32.totalorder %s15, 0
    %p125 = por %p123, %p124
    %p126 = scmp.ne.s32.totalorder %s112, %s113
    %p127 = scmp.eq.s32.totalorder %s16, 1
    %p128 = por %p126, %p127
    %p130 = scmp.ne.s32.totalorder %s113, %s129
    %p131 = scmp.eq.s32.totalorder %s16, 0
    %p132 = por %p130, %p131
    %p133 = scmp.le.s32.totalorder 1, %s10
    %p134 = scmp.lt.s32.totalorder %s10, 3
    %p135 = pnand %p133, %p134
    %p136 = pneg %p135
    // Predicated region
    $region9: #{_lambda_.1} parent=5 // pred_check
      _
    $region10: #{_lambda_.1} parent=5 // pred_check_branch
      %138 = sbr.rel (%p135) target = $region12
    $region11: #{_lambda_.1} parent=5 // pred_region
      %s139 = ssub.s32 %s10, 1
      // Predicated region
      $region13: #{_lambda_.1} parent=11 // pred_check
        %p140 = pneg %p57
      $region14: #{_lambda_.1} parent=11 // pred_check_branch
        %142 = sbr.rel (%p140) target = $region16
      $region15: #{_lambda_.1} parent=11 // pred_region
        _
      $region16: #{_lambda_.1} parent=11 // pred_fallthru
        _
      // Predicated region
      $region17: #{_lambda_.1} parent=11 // pred_check
        %p143 = pneg %p78
      $region18: #{_lambda_.1} parent=11 // pred_check_branch
        %145 = sbr.rel (%p143) target = $region20
      $region19: #{_lambda_.1} parent=11 // pred_region
        _
      $region20: #{_lambda_.1} parent=11 // pred_fallthru
        _
      // Predicated region
      $region21: #{_lambda_.1} parent=11 // pred_check
        %p146 = pneg %p99
      $region22: #{_lambda_.1} parent=11 // pred_check_branch
        %148 = sbr.rel (%p146) target = $region24
      $region23: #{_lambda_.1} parent=11 // pred_region
        _
      $region24: #{_lambda_.1} parent=11 // pred_fallthru
        _
    $region12: #{_lambda_.1} parent=5 // pred_fallthru
      _
    %p149 = scmp.lt.s32.totalorder %s10, 2
    // Predicated region
    $region25: #{_lambda_.1} parent=5 // pred_check
      %p150 = pneg %p149
    $region26: #{_lambda_.1} parent=5 // pred_check_branch
      %152 = sbr.rel (%p150) target = $region28
    $region27: #{_lambda_.1} parent=5 // pred_region
      // Predicated region
      $region29: #{_lambda_.1} parent=27 // pred_check
        %p153 = pneg %p30
      $region30: #{_lambda_.1} parent=27 // pred_check_branch
        %155 = sbr.rel (%p153) target = $region32
      $region31: #{_lambda_.1} parent=27 // pred_region
        %p156 = scmp.lt.s32.totalorder %s10, 1
        %s157 = scalar_select %p156, %s10, 1
        %s158 = smul.addr %s157, 3
        %s159 = smul.addr %s158, 4
        %s160 = scalar_lea.vmem %s0, %s159
      $region32: #{_lambda_.1} parent=27 // pred_fallthru
        _
    $region28: #{_lambda_.1} parent=5 // pred_fallthru
      _
    %p161 = scmp.le.s32.totalorder 1, %s10
    %p162 = scmp.lt.s32.totalorder %s10, 3
    %p163 = pnand %p161, %p162
    %p164 = pneg %p163
    // Predicated region
    $region33: #{_lambda_.1} parent=5 // pred_check
      _
    $region34: #{_lambda_.1} parent=5 // pred_check_branch
      %166 = sbr.rel (%p163) target = $region36
    $region35: #{_lambda_.1} parent=5 // pred_region
      %s167 = ssub.s32 %s10, 1
      %p168 = scmp.lt.s32.totalorder %s15, 1
      %s169 = scalar_select %p168, %s15, 1
      %s170 = smul.addr %s169, 3
      %s171 = smul.addr %s170, 4
      %s172 = scalar_lea.vmem %s0, %s171
      %p173 = pneg %p36
      %p174 = pneg %p33
      %p175 = pneg %p57
      %p176 = pneg %p54
      %p177 = pneg %p78
      %p178 = pneg %p75
      %p179 = pneg %p99
      %p180 = pneg %p96
      %p181 = pneg %p125
      %p182 = pneg %p122
      %p183 = scmp.lt.s32.totalorder %s15, 1
      %s184 = scalar_select %p183, %s15, 1
      %s185 = smul.addr %s184, 8
      %s186 = scalar_lea.vmem %s4, %s185
      %p187 = scmp.lt.s32.totalorder %s15, 1
      %s188 = scalar_select %p187, %s15, 1
      %s189 = smul.addr %s188, 3
      %s190 = smul.addr %s189, 4
      %s191 = scalar_lea.vmem %s0, %s190
      %p192 = scmp.lt.s32.totalorder %s15, 1
      %s193 = scalar_select %p192, %s15, 1
      %s194 = smul.addr %s193, 8
      %s195 = scalar_lea.vmem %s4, %s194
      %v196 = vld [vmem:[%s191] sm:$0xff]
      %v197 = vld [vmem:[%s191 + $0x8] sm:$0xf]
      %v198 = vld [vmem:[%s1] sm:$0xff]
      %v199 = vld [vmem:[%s1 + $0x8] sm:$0xff]
      %v200 = vld [vmem:[%s1 + $0x10] sm:$0xff]
      %v201 = vld [vmem:[%s1 + $0x18] sm:$0xff]
      %v202 = vld [vmem:[%s1 + $0x20] sm:$0xff]
      %v203 = vld [vmem:[%s1 + $0x28] sm:$0xff]
      %v204 = vld [vmem:[%s1 + $0x30] sm:$0xff]
      %v205 = vld [vmem:[%s1 + $0x38] sm:$0xff]
      %v206 = vld [vmem:[%s1 + $0x40] sm:$0xff]
      %v207 = vld [vmem:[%s1 + $0x48] sm:$0xff]
      %v208 = vld [vmem:[%s1 + $0x50] sm:$0xff]
      %v209 = vld [vmem:[%s1 + $0x58] sm:$0xff]
      %v210 = vld [vmem:[%s1 + $0x60] sm:$0xff]
      %v211 = vld [vmem:[%s1 + $0x68] sm:$0xff]
      %v212 = vld [vmem:[%s1 + $0x70] sm:$0xff]
      %v213 = vld [vmem:[%s1 + $0x78] sm:$0xff]
      %v214 = vld [vmem:[%s1 + $0x80] sm:$0xff]
      %v215 = vld [vmem:[%s1 + $0x88] sm:$0xff]
      %v216 = vld [vmem:[%s1 + $0x90] sm:$0xff]
      %v217 = vld [vmem:[%s1 + $0x98] sm:$0xff]
      %v218 = vld [vmem:[%s1 + $0xa0] sm:$0xff]
      %v219 = vld [vmem:[%s1 + $0xa8] sm:$0xff]
      %v220 = vld [vmem:[%s1 + $0xb0] sm:$0xff]
      %v221 = vld [vmem:[%s1 + $0xb8] sm:$0xff]
      %v222 = vld [vmem:[%s1 + $0xc0] sm:$0xff]
      %v223 = vld [vmem:[%s1 + $0xc8] sm:$0xff]
      %v224 = vld [vmem:[%s1 + $0xd0] sm:$0xff]
      %v225 = vld [vmem:[%s1 + $0xd8] sm:$0xff]
      %v226 = vld [vmem:[%s1 + $0xe0] sm:$0xff]
      %v227 = vld [vmem:[%s1 + $0xe8] sm:$0xff]
      %v228 = vld [vmem:[%s1 + $0xf0] sm:$0xff]
      %v229 = vld [vmem:[%s1 + $0xf8] sm:$0xff]
      %v230 = vld [vmem:[%s1 + $0x100] sm:$0xff]
      %v231 = vld [vmem:[%s1 + $0x108] sm:$0xff]
      %v232 = vld [vmem:[%s1 + $0x110] sm:$0xff]
      %v233 = vld [vmem:[%s1 + $0x118] sm:$0xff]
      %v234 = vld [vmem:[%s1 + $0x120] sm:$0xff]
      %v235 = vld [vmem:[%s1 + $0x128] sm:$0xff]
      %v236 = vld [vmem:[%s1 + $0x130] sm:$0xff]
      %v237 = vld [vmem:[%s1 + $0x138] sm:$0xff]
      %v238 = vld [vmem:[%s1 + $0x140] sm:$0xff]
      %v239 = vld [vmem:[%s1 + $0x148] sm:$0xff]
      %v240 = vld [vmem:[%s1 + $0x150] sm:$0xff]
      %v241 = vld [vmem:[%s1 + $0x158] sm:$0xff]
      %v242 = vld [vmem:[%s1 + $0x160] sm:$0xff]
      %v243 = vld [vmem:[%s1 + $0x168] sm:$0xff]
      %v244 = vld [vmem:[%s1 + $0x170] sm:$0xff]
      %v245 = vld [vmem:[%s1 + $0x178] sm:$0xff]
      %v246 = vld [vmem:[%s3] ss:$2 sm:$0x3]
      %v248 = vperm.slane %v246, 0
      %v249 = vperm.slane %v246, 1
      %v254 = vunpack.c.l.b16 %v196
      %v255 = vunpack.c.h.b16 %v196
      %v256 = vunpack.c.l.b16 %v197
      %v257 = vpack.c.b16 %v254, %v254
      %v258 = vpack.c.b16 %v255, %v255
      %v259 = vpack.c.b16 %v256, %v256
      %v311 = vunpack.c.l.b16 %v198
      %v312 = vunpack.c.h.b16 %v198
      %v313 = vunpack.c.l.b16 %v199
      %v314 = vunpack.c.h.b16 %v199
      %v315 = vunpack.c.l.b16 %v200
      %v316 = vunpack.c.h.b16 %v200
      %v317 = vunpack.c.l.b16 %v201
      %v318 = vunpack.c.h.b16 %v201
      %v319 = vunpack.c.l.b16 %v202
      %v320 = vunpack.c.h.b16 %v202
      %v321 = vunpack.c.l.b16 %v203
      %v322 = vunpack.c.h.b16 %v203
      %v323 = vunpack.c.l.b16 %v204
      %v324 = vunpack.c.h.b16 %v204
      %v325 = vunpack.c.l.b16 %v205
      %v326 = vunpack.c.h.b16 %v205
      %v327 = vunpack.c.l.b16 %v206
      %v328 = vunpack.c.h.b16 %v206
      %v329 = vunpack.c.l.b16 %v207
      %v330 = vunpack.c.h.b16 %v207
      %v331 = vunpack.c.l.b16 %v208
      %v332 = vunpack.c.h.b16 %v208
      %v333 = vunpack.c.l.b16 %v209
      %v334 = vunpack.c.h.b16 %v209
      %v335 = vunpack.c.l.b16 %v210
      %v336 = vunpack.c.h.b16 %v210
      %v337 = vunpack.c.l.b16 %v211
      %v338 = vunpack.c.h.b16 %v211
      %v339 = vunpack.c.l.b16 %v212
      %v340 = vunpack.c.h.b16 %v212
      %v341 = vunpack.c.l.b16 %v213
      %v342 = vunpack.c.h.b16 %v213
      %v343 = vunpack.c.l.b16 %v214
      %v344 = vunpack.c.h.b16 %v214
      %v345 = vunpack.c.l.b16 %v215
      %v346 = vunpack.c.h.b16 %v215
      %v347 = vunpack.c.l.b16 %v216
      %v348 = vunpack.c.h.b16 %v216
      %v349 = vunpack.c.l.b16 %v217
      %v350 = vunpack.c.h.b16 %v217
      %v351 = vunpack.c.l.b16 %v218
      %v352 = vunpack.c.h.b16 %v218
      %v353 = vunpack.c.l.b16 %v219
      %v354 = vunpack.c.h.b16 %v219
      %v355 = vunpack.c.l.b16 %v220
      %v356 = vunpack.c.h.b16 %v220
      %v357 = vunpack.c.l.b16 %v221
      %v358 = vunpack.c.h.b16 %v221
      %v359 = vunpack.c.l.b16 %v222
      %v360 = vunpack.c.h.b16 %v222
      %v361 = vunpack.c.l.b16 %v223
      %v362 = vunpack.c.h.b16 %v223
      %v363 = vunpack.c.l.b16 %v224
      %v364 = vunpack.c.h.b16 %v224
      %v365 = vunpack.c.l.b16 %v225
      %v366 = vunpack.c.h.b16 %v225
      %v367 = vunpack.c.l.b16 %v226
      %v368 = vunpack.c.h.b16 %v226
      %v369 = vunpack.c.l.b16 %v227
      %v370 = vunpack.c.h.b16 %v227
      %v371 = vunpack.c.l.b16 %v228
      %v372 = vunpack.c.h.b16 %v228
      %v373 = vunpack.c.l.b16 %v229
      %v374 = vunpack.c.h.b16 %v229
      %v375 = vunpack.c.l.b16 %v230
      %v376 = vunpack.c.h.b16 %v230
      %v377 = vunpack.c.l.b16 %v231
      %v378 = vunpack.c.h.b16 %v231
      %v379 = vunpack.c.l.b16 %v232
      %v380 = vunpack.c.h.b16 %v232
      %v381 = vunpack.c.l.b16 %v233
      %v382 = vunpack.c.h.b16 %v233
      %v383 = vunpack.c.l.b16 %v234
      %v384 = vunpack.c.h.b16 %v234
      %v385 = vunpack.c.l.b16 %v235
      %v386 = vunpack.c.h.b16 %v235
      %v387 = vunpack.c.l.b16 %v236
      %v388 = vunpack.c.h.b16 %v236
      %v389 = vunpack.c.l.b16 %v237
      %v390 = vunpack.c.h.b16 %v237
      %v391 = vunpack.c.l.b16 %v238
      %v392 = vunpack.c.h.b16 %v238
      %v393 = vunpack.c.l.b16 %v239
      %v394 = vunpack.c.h.b16 %v239
      %v395 = vunpack.c.l.b16 %v240
      %v396 = vunpack.c.h.b16 %v240
      %v397 = vunpack.c.l.b16 %v241
      %v398 = vunpack.c.h.b16 %v241
      %v399 = vunpack.c.l.b16 %v242
      %v400 = vunpack.c.h.b16 %v242
      %v401 = vunpack.c.l.b16 %v243
      %v402 = vunpack.c.h.b16 %v243
      %v403 = vunpack.c.l.b16 %v244
      %v404 = vunpack.c.h.b16 %v244
      %v405 = vunpack.c.l.b16 %v245
      %v406 = vunpack.c.h.b16 %v245
      %v407 = vpack.c.b16 %v313, %v311
      %v408 = vpack.c.b16 %v314, %v312
      %v409 = vpack.c.b16 %v317, %v315
      %v410 = vpack.c.b16 %v318, %v316
      %v411 = vpack.c.b16 %v321, %v319
      %v412 = vpack.c.b16 %v322, %v320
      %v413 = vpack.c.b16 %v325, %v323
      %v414 = vpack.c.b16 %v326, %v324
      %v415 = vpack.c.b16 %v329, %v327
      %v416 = vpack.c.b16 %v330, %v328
      %v417 = vpack.c.b16 %v333, %v331
      %v418 = vpack.c.b16 %v334, %v332
      %v419 = vpack.c.b16 %v337, %v335
      %v420 = vpack.c.b16 %v338, %v336
      %v421 = vpack.c.b16 %v341, %v339
      %v422 = vpack.c.b16 %v342, %v340
      %v423 = vpack.c.b16 %v345, %v343
      %v424 = vpack.c.b16 %v346, %v344
      %v425 = vpack.c.b16 %v349, %v347
      %v426 = vpack.c.b16 %v350, %v348
      %v427 = vpack.c.b16 %v353, %v351
      %v428 = vpack.c.b16 %v354, %v352
      %v429 = vpack.c.b16 %v357, %v355
      %v430 = vpack.c.b16 %v358, %v356
      %v431 = vpack.c.b16 %v361, %v359
      %v432 = vpack.c.b16 %v362, %v360
      %v433 = vpack.c.b16 %v365, %v363
      %v434 = vpack.c.b16 %v366, %v364
      %v435 = vpack.c.b16 %v369, %v367
      %v436 = vpack.c.b16 %v370, %v368
      %v437 = vpack.c.b16 %v373, %v371
      %v438 = vpack.c.b16 %v374, %v372
      %v439 = vpack.c.b16 %v377, %v375
      %v440 = vpack.c.b16 %v378, %v376
      %v441 = vpack.c.b16 %v381, %v379
      %v442 = vpack.c.b16 %v382, %v380
      %v443 = vpack.c.b16 %v385, %v383
      %v444 = vpack.c.b16 %v386, %v384
      %v445 = vpack.c.b16 %v389, %v387
      %v446 = vpack.c.b16 %v390, %v388
      %v447 = vpack.c.b16 %v393, %v391
      %v448 = vpack.c.b16 %v394, %v392
      %v449 = vpack.c.b16 %v397, %v395
      %v450 = vpack.c.b16 %v398, %v396
      %v451 = vpack.c.b16 %v401, %v399
      %v452 = vpack.c.b16 %v402, %v400
      %v453 = vpack.c.b16 %v405, %v403
      %v454 = vpack.c.b16 %v406, %v404
      %503 = vmatpush.bf16.msra.mxu0 %v421
      %504 = vmatpush.bf16.msra.mxu0 %v419
      %505 = vmatpush.bf16.msra.mxu0 %v417
      %506 = vmatpush.bf16.msra.mxu0 %v415
      %507 = vmatpush.bf16.msra.mxu0 %v413
      %508 = vmatpush.bf16.msra.mxu0 %v411
      %509 = vmatpush.bf16.msra.mxu0 %v409
      %510 = vmatpush.bf16.msra.mxu0 %v407
      %511 = vmatmul.bf16.gmra.mxu0 %v257
      %v512 = vpop.f32.mrf.mxu0
      %v513 = vadd.f32 %v248, %v512
      %v514 = vpop.f32.mrf.mxu0
      %515 = vdwg.mxu0
      %516 = vmatpush.bf16.msra.mxu0 %v437
      %517 = vmatpush.bf16.msra.mxu0 %v435
      %518 = vmatpush.bf16.msra.mxu0 %v433
      %519 = vmatpush.bf16.msra.mxu0 %v431
      %520 = vmatpush.bf16.msra.mxu0 %v429
      %521 = vmatpush.bf16.msra.mxu0 %v427
      %522 = vmatpush.bf16.msra.mxu0 %v425
      %523 = vmatpush.bf16.msra.mxu0 %v423
      %524 = vmatmul.bf16.gmra.mxu0 %v258
      %v525 = vpop.f32.mrf.mxu0
      %v526 = vadd.f32 %v513, %v525
      %v527 = vpop.f32.mrf.mxu0
      %528 = vdwg.mxu0
      %529 = vmatpush.bf16.msra.mxu0 %v453
      %530 = vmatpush.bf16.msra.mxu0 %v451
      %531 = vmatpush.bf16.msra.mxu0 %v449
      %532 = vmatpush.bf16.msra.mxu0 %v447
      %533 = vmatpush.bf16.msra.mxu0 %v445
      %534 = vmatpush.bf16.msra.mxu0 %v443
      %535 = vmatpush.bf16.msra.mxu0 %v441
      %536 = vmatpush.bf16.msra.mxu0 %v439
      %537 = vmatmul.bf16.gmra.mxu0 %v259
      %v538 = vpop.f32.mrf.mxu0
      %v539 = vadd.f32 %v526, %v538
      %v540 = vpop.f32.mrf.mxu0
      %541 = vdwg.mxu0
      %542 = vmatpush.bf16.msra.mxu0 %v422
      %543 = vmatpush.bf16.msra.mxu0 %v420
      %544 = vmatpush.bf16.msra.mxu0 %v418
      %545 = vmatpush.bf16.msra.mxu0 %v416
      %546 = vmatpush.bf16.msra.mxu0 %v414
      %547 = vmatpush.bf16.msra.mxu0 %v412
      %548 = vmatpush.bf16.msra.mxu0 %v410
      %549 = vmatpush.bf16.msra.mxu0 %v408
      %550 = vmatmul.bf16.gmra.mxu0 %v257
      %v551 = vpop.f32.mrf.mxu0
      %v552 = vadd.f32 %v249, %v551
      %v553 = vpop.f32.mrf.mxu0
      %554 = vdwg.mxu0
      %555 = vmatpush.bf16.msra.mxu0 %v438
      %556 = vmatpush.bf16.msra.mxu0 %v436
      %557 = vmatpush.bf16.msra.mxu0 %v434
      %558 = vmatpush.bf16.msra.mxu0 %v432
      %559 = vmatpush.bf16.msra.mxu0 %v430
      %560 = vmatpush.bf16.msra.mxu0 %v428
      %561 = vmatpush.bf16.msra.mxu0 %v426
      %562 = vmatpush.bf16.msra.mxu0 %v424
      %563 = vmatmul.bf16.gmra.mxu0 %v258
      %v564 = vpop.f32.mrf.mxu0
      %v565 = vadd.f32 %v552, %v564
      %v566 = vpop.f32.mrf.mxu0
      %567 = vdwg.mxu0
      %568 = vmatpush.bf16.msra.mxu0 %v454
      %569 = vmatpush.bf16.msra.mxu0 %v452
      %570 = vmatpush.bf16.msra.mxu0 %v450
      %571 = vmatpush.bf16.msra.mxu0 %v448
      %572 = vmatpush.bf16.msra.mxu0 %v446
      %573 = vmatpush.bf16.msra.mxu0 %v444
      %574 = vmatpush.bf16.msra.mxu0 %v442
      %575 = vmatpush.bf16.msra.mxu0 %v440
      %576 = vmatmul.bf16.gmra.mxu0 %v259
      %v577 = vpop.f32.mrf.mxu0
      %v578 = vadd.f32 %v565, %v577
      %v579 = vpop.f32.mrf.mxu0
      %580 = vdwg.mxu0
      %v581 = vlaneseq
      %v582 = vshrl.u32 %v581, 7
      %s583 = smul.u32 %s15, 8
      %v584 = vstv %s583
      %v585 = vadd.s32 %v582, %v584
      %v586 = vcvt.s32.f32 %v585
      %v587 = vadd.f32 %v586, 0.5
      %v588 = vmul.f32 %v587, 0.5
      %v589 = vfloor.f32 %v588
      %v590 = vmul.f32 %v589, 2.0
      %v591 = vsub.f32 %v586, %v590
      %v592 = vcvt.f32.s32.to.zero.pseudo %v591
      %v593 = vlaneseq
      %v594 = vand.u32 %v593, 127
      %v595 = vmul.u32 %v592, 8
      %v596 = vsub.s32 1, %v595
      %v597 = vmul.u32 %v596, 16
      %v598 = vsub.s32 17, %v595
      %v599 = vmul.u32 %v598, 16
      %vm600 = vcmp.ge.s32.totalorder %v594, %v597
      %vm601 = vcmp.lt.s32.totalorder %v594, %v599
      %vm602 = vmand %vm600, %vm601
      %v603 = vxor.u32 %v578, 2147483648
      %v604 = vmul.f32 %v603, 1.442695
      %v605 = vpow.pop %v604
      %v606 = vadd.f32 %v605, 1.0
      %v607 = vrcp.pop %v606
      %v608 = vmul.f32 %v606, %v607
      %v609 = vsub.f32 1.0, %v608
      %v610 = vmul.f32 %v607, %v609
      %v611 = vadd.f32 %v607, %v610
      %vm612 = vweird.f32 %v606
      %vm613 = vweird.f32 %v607
      %vm614 = vmor %vm612, %vm613
      %v615 = vsel %vm614, %v607, %v611
      %v616 = vand.u32 2147483647, %v606
      %vm617 = vcmp.eq.f32.partialorder %v616, 8.507059e+37
      %v618 = vand.u32 %v606, 2147483648
      %v619 = vor.u32 1.1754944e-38, %v618
      %v620 = vsel %vm617, %v619, %v615
      %v621 = vmul.f32 1.0, %v620
      %v622 = vmul.f32 %v539, %v621
      %v623 = vsel %vm602, %v622, 0.0
      %v624 = vpack.c.bf16 %v623, %v623
      %v625 = vld [vmem:[%s2] sm:$0xff]
      %v626 = vld [vmem:[%s2 + $0x8] sm:$0xff]
      %v627 = vld [vmem:[%s2 + $0x10] sm:$0xff]
      %v628 = vld [vmem:[%s2 + $0x18] sm:$0xff]
      %v629 = vld [vmem:[%s2 + $0x20] sm:$0xff]
      %v630 = vld [vmem:[%s2 + $0x28] sm:$0xff]
      %v631 = vld [vmem:[%s2 + $0x30] sm:$0xff]
      %v632 = vld [vmem:[%s2 + $0x38] sm:$0xff]
      %v633 = vld [vmem:[%s2 + $0x40] sm:$0xff]
      %v634 = vld [vmem:[%s2 + $0x48] sm:$0xff]
      %v635 = vld [vmem:[%s2 + $0x50] sm:$0xff]
      %v636 = vld [vmem:[%s2 + $0x58] sm:$0xff]
      %v637 = vld [vmem:[%s2 + $0x60] sm:$0xff]
      %v638 = vld [vmem:[%s2 + $0x68] sm:$0xff]
      %v639 = vld [vmem:[%s2 + $0x70] sm:$0xff]
      %v640 = vld [vmem:[%s2 + $0x78] sm:$0xff]
      %s641 = scalar_lea.vmem %s3, 1
      %v642 = vld [vmem:[%s641] ss:$2 sm:$0x3]
      %v644 = vperm.slane %v642, 0
      %v645 = vperm.slane %v642, 1
      %v664 = vunpack.c.l.b16 %v625
      %v665 = vunpack.c.h.b16 %v625
      %v666 = vunpack.c.l.b16 %v626
      %v667 = vunpack.c.h.b16 %v626
      %v668 = vunpack.c.l.b16 %v627
      %v669 = vunpack.c.h.b16 %v627
      %v670 = vunpack.c.l.b16 %v628
      %v671 = vunpack.c.h.b16 %v628
      %v672 = vunpack.c.l.b16 %v629
      %v673 = vunpack.c.h.b16 %v629
      %v674 = vunpack.c.l.b16 %v630
      %v675 = vunpack.c.h.b16 %v630
      %v676 = vunpack.c.l.b16 %v631
      %v677 = vunpack.c.h.b16 %v631
      %v678 = vunpack.c.l.b16 %v632
      %v679 = vunpack.c.h.b16 %v632
      %v680 = vunpack.c.l.b16 %v633
      %v681 = vunpack.c.h.b16 %v633
      %v682 = vunpack.c.l.b16 %v634
      %v683 = vunpack.c.h.b16 %v634
      %v684 = vunpack.c.l.b16 %v635
      %v685 = vunpack.c.h.b16 %v635
      %v686 = vunpack.c.l.b16 %v636
      %v687 = vunpack.c.h.b16 %v636
      %v688 = vunpack.c.l.b16 %v637
      %v689 = vunpack.c.h.b16 %v637
      %v690 = vunpack.c.l.b16 %v638
      %v691 = vunpack.c.h.b16 %v638
      %v692 = vunpack.c.l.b16 %v639
      %v693 = vunpack.c.h.b16 %v639
      %v694 = vunpack.c.l.b16 %v640
      %v695 = vunpack.c.h.b16 %v640
      %v696 = vpack.c.b16 %v666, %v664
      %v697 = vpack.c.b16 %v667, %v665
      %v698 = vpack.c.b16 %v670, %v668
      %v699 = vpack.c.b16 %v671, %v669
      %v700 = vpack.c.b16 %v674, %v672
      %v701 = vpack.c.b16 %v675, %v673
      %v702 = vpack.c.b16 %v678, %v676
      %v703 = vpack.c.b16 %v679, %v677
      %v704 = vpack.c.b16 %v682, %v680
      %v705 = vpack.c.b16 %v683, %v681
      %v706 = vpack.c.b16 %v686, %v684
      %v707 = vpack.c.b16 %v687, %v685
      %v708 = vpack.c.b16 %v690, %v688
      %v709 = vpack.c.b16 %v691, %v689
      %v710 = vpack.c.b16 %v694, %v692
      %v711 = vpack.c.b16 %v695, %v693
      %728 = vmatpush.bf16.msra.mxu0 %v710
      %729 = vmatpush.bf16.msra.mxu0 %v708
      %730 = vmatpush.bf16.msra.mxu0 %v706
      %731 = vmatpush.bf16.msra.mxu0 %v704
      %732 = vmatpush.bf16.msra.mxu0 %v702
      %733 = vmatpush.bf16.msra.mxu0 %v700
      %734 = vmatpush.bf16.msra.mxu0 %v698
      %735 = vmatpush.bf16.msra.mxu0 %v696
      %736 = vmatmul.bf16.gmra.mxu0 %v624
      %v737 = vpop.f32.mrf.mxu0
      %v738 = vadd.f32 %v644, %v737
      %v739 = vpop.f32.mrf.mxu0
      %740 = vdwg.mxu0
      %741 = vmatpush.bf16.msra.mxu0 %v711
      %742 = vmatpush.bf16.msra.mxu0 %v709
      %743 = vmatpush.bf16.msra.mxu0 %v707
      %744 = vmatpush.bf16.msra.mxu0 %v705
      %745 = vmatpush.bf16.msra.mxu0 %v703
      %746 = vmatpush.bf16.msra.mxu0 %v701
      %747 = vmatpush.bf16.msra.mxu0 %v699
      %748 = vmatpush.bf16.msra.mxu0 %v697
      %749 = vmatmul.bf16.gmra.mxu0 %v624
      %v750 = vpop.f32.mrf.mxu0
      %v751 = vadd.f32 %v645, %v750
      %v752 = vpop.f32.mrf.mxu0
      %753 = vdwg.mxu0
      %v754 = vxor.u32 %v751, 2147483648
      %v755 = vmul.f32 %v754, 1.442695
      %v756 = vpow.pop %v755
      %v757 = vadd.f32 %v756, 1.0
      %v758 = vrcp.pop %v757
      %v759 = vmul.f32 %v757, %v758
      %v760 = vsub.f32 1.0, %v759
      %v761 = vmul.f32 %v758, %v760
      %v762 = vadd.f32 %v758, %v761
      %vm763 = vweird.f32 %v757
      %vm764 = vweird.f32 %v758
      %vm765 = vmor %vm763, %vm764
      %v766 = vsel %vm765, %v758, %v762
      %v767 = vand.u32 2147483647, %v757
      %vm768 = vcmp.eq.f32.partialorder %v767, 8.507059e+37
      %v769 = vand.u32 %v757, 2147483648
      %v770 = vor.u32 1.1754944e-38, %v769
      %v771 = vsel %vm768, %v770, %v766
      %v772 = vmul.f32 1.0, %v771
      %v773 = vmul.f32 %v738, %v772
      %vm774 = vcmask 130048
      %775 = vst.msk [vmem:[%s195] sm:$0xff] %vm774, %v773
      %p776 = scmp.lt.s32.totalorder %s15, 1
      %s777 = scalar_select %p776, %s15, 1
      %s778 = smul.addr %s777, 8
      %s779 = scalar_lea.vmem %s4, %s778
      // Predicated region
      $region37: #{_lambda_.1} parent=35 // pred_check
        %p780 = pneg %p122
      $region38: #{_lambda_.1} parent=35 // pred_check_branch
        %782 = sbr.rel (%p780) target = $region40
      $region39: #{_lambda_.1} parent=35 // pred_region
        _
      $region40: #{_lambda_.1} parent=35 // pred_fallthru
        _
    $region36: #{_lambda_.1} parent=5 // pred_fallthru
      _
    %p783 = scmp.le.s32.totalorder 2, %s10
    // Predicated region
    $region41: #{_lambda_.1} parent=5 // pred_check
      %p784 = pneg %p783
    $region42: #{_lambda_.1} parent=5 // pred_check_branch
      %786 = sbr.rel (%p784) target = $region44
    $region43: #{_lambda_.1} parent=5 // pred_region
      %s787 = ssub.s32 %s10, 2
      // Predicated region
      $region45: #{_lambda_.1} parent=43 // pred_check
        %p788 = pneg %p128
      $region46: #{_lambda_.1} parent=43 // pred_check_branch
        %790 = sbr.rel (%p788) target = $region48
      $region47: #{_lambda_.1} parent=43 // pred_region
        %p791 = scmp.lt.s32.totalorder %s16, 1
        %s792 = scalar_select %p791, %s16, 1
        %s793 = smul.addr %s792, 8
        %s794 = scalar_lea.vmem %s4, %s793
      $region48: #{_lambda_.1} parent=43 // pred_fallthru
        _
    $region44: #{_lambda_.1} parent=5 // pred_fallthru
      _
  $region6: #{_lambda_.1} parent=0 // loop_footer
    %s14 = sadd.s32 1, %s10
  $region7: #{_lambda_.1} parent=0 // loop_footer_branch
    %9 = sbr.rel target = $region3
  $region8: #{_lambda_.1} parent=0 // loop_exit
    _

</llo_original>
